<compile_context>
chip_gen: v6e
topology: v6e:2x2x1
jax: 0.10.0
libtpu: 0.0.40
codegen_flags: <defaults>
</compile_context>

<pallas_src>
import functools
import math

import jax
import jax.numpy as jnp
from jax.experimental import pallas as pl
from jax.experimental.pallas import tpu as pltpu

_VMEM_LIMIT_BYTES = 32 * 1024 * 1024   # safe scoped limit on v5e/v6e/v7x
_TARGET_TILE_BYTES = 2 * 1024 * 1024   # per-block target; 4x buffers ~= 8 MiB


def _block_transpose_kernel(perm, x_ref, o_ref):
    # Pure data movement: block-level permutation is handled by the BlockSpec
    # index_maps; only the swapped sub-tiles move inside VMEM here.
    o_ref[...] = jnp.transpose(x_ref[...], perm)


def _compiler_params(n_grid):
    return pltpu.CompilerParams(
        dimension_semantics=("parallel",) * n_grid,
        vmem_limit_bytes=_VMEM_LIMIT_BYTES,
    )


def _cost(nbytes):
    # Zero-compute streaming copy: read + write of the whole tensor.
    return pl.CostEstimate(flops=0, transcendentals=0, bytes_accessed=2 * nbytes)


def _transpose_no_lane(x, d0, d1, out_shape):
    """Swap of two axes, neither of which is the last (lane) axis."""
    shape = x.shape
    itemsize = x.dtype.itemsize
    A = math.prod(shape[:d0])
    B = shape[d0]
    Cm = math.prod(shape[d0 + 1:d1])
    D = shape[d1]
    E = math.prod(shape[d1 + 1:])          # untouched trailing dims (lane-dense)
    xv = x.reshape(A, B, Cm, D, E)

    # Tile the two swapped axes; E stays whole so both blocks are lane-dense.
    row_bytes = max(1, E * itemsize)
    rows_budget = max(64, _TARGET_TILE_BYTES // row_bytes)
    tb = B if B <= 8 else 8                                   # full dim or mult of 8
    td_budget = max(8, rows_budget // tb)
    td = D if D <= td_budget else max(8, (td_budget // 8) * 8)
    if td == D:
        # D is small: spend leftover budget on the other swapped axis.
        tb_budget = max(tb, rows_budget // max(1, td))
        tb = B if B <= tb_budget else max(8, (tb_budget // 8) * 8)

    grid = (A, Cm, pl.cdiv(B, tb), pl.cdiv(D, td))
    y = pl.pallas_call(
        functools.partial(_block_transpose_kernel, (0, 3, 2, 1, 4)),
        out_shape=jax.ShapeDtypeStruct((A, D, Cm, B, E), x.dtype),
        grid=grid,
        in_specs=[pl.BlockSpec((1, tb, 1, td, E),
                               lambda a, c, bi, di: (a, bi, c, di, 0))],
        out_specs=pl.BlockSpec((1, td, 1, tb, E),
                               lambda a, c, bi, di: (a, di, c, bi, 0)),
        compiler_params=_compiler_params(len(grid)),
        cost_estimate=_cost(x.size * itemsize),
    )(xv)
    return y.reshape(out_shape)


def _transpose_lane_adjacent(x, d0, out_shape):
    """Swap of axis d0 with the last (lane) axis, with no untouched dims between."""
    shape = x.shape
    A = math.prod(shape[:d0])
    B = shape[d0]
    L = shape[-1]
    xv = x.reshape(A, B, L)
    tb = B if B <= 256 else 256            # full dim or multiple of 128
    tl = L if L <= 256 else 256
    grid = (A, pl.cdiv(B, tb), pl.cdiv(L, tl))
    y = pl.pallas_call(
        functools.partial(_block_transpose_kernel, (0, 2, 1)),
        out_shape=jax.ShapeDtypeStruct((A, L, B), x.dtype),
        grid=grid,
        in_specs=[pl.BlockSpec((1, tb, tl), lambda a, bi, li: (a, bi, li))],
        out_specs=pl.BlockSpec((1, tl, tb), lambda a, bi, li: (a, li, bi)),
        compiler_params=_compiler_params(len(grid)),
        cost_estimate=_cost(x.size * x.dtype.itemsize),
    )(xv)
    return y.reshape(out_shape)


def _transpose_whole(x, perm, out_shape):
    # TODO(synk): tile this rare path (swap of a non-adjacent axis with the
    # lane axis); currently the whole array must fit in VMEM.
    return pl.pallas_call(
        functools.partial(_block_transpose_kernel, perm),
        out_shape=jax.ShapeDtypeStruct(out_shape, x.dtype),
        in_specs=[pl.BlockSpec(memory_space=pltpu.MemorySpace.VMEM)],
        out_specs=pl.BlockSpec(memory_space=pltpu.MemorySpace.VMEM),
        compiler_params=pltpu.CompilerParams(vmem_limit_bytes=_VMEM_LIMIT_BYTES),
        cost_estimate=_cost(x.size * x.dtype.itemsize),
    )(x)


def transpose_pallas(x, dim0, dim1):
    """Pallas equivalent of torch.Tensor.transpose(dim0, dim1)."""
    ndim = x.ndim
    d0 = dim0 % ndim
    d1 = dim1 % ndim
    if d0 == d1:
        return x
    if d0 > d1:
        d0, d1 = d1, d0

    perm = list(range(ndim))
    perm[d0], perm[d1] = perm[d1], perm[d0]
    perm = tuple(perm)
    out_shape = tuple(x.shape[p] for p in perm)

    if d1 < ndim - 1:
        # Lane axis untouched: streaming copy with block-index permutation.
        return _transpose_no_lane(x, d0, d1, out_shape)

    between = math.prod(x.shape[d0 + 1:d1])
    if between == 1:
        # Swap with the lane axis (e.g. last-two-dims transpose): tiled XLU path.
        return _transpose_lane_adjacent(x, d0, out_shape)
    return _transpose_whole(x, perm, out_shape)


if __name__ == "__main__":
    key = jax.random.PRNGKey(0)
    # Small NCHW input: batch=2, channels=4, H=16, W=128 (lane-dense last dim).
    x = jax.random.normal(key, (2, 4, 16, 128), dtype=jnp.float32)

    dim0, dim1 = 1, 2  # matches Transpose(dim0=1, dim1=2)
    y = transpose_pallas(x, dim0, dim1)
    y = jax.block_until_ready(y)

    y_ref = jnp.swapaxes(x, dim0, dim1)
    assert y.shape == y_ref.shape, (y.shape, y_ref.shape)
    assert y.dtype == y_ref.dtype
    assert bool(jnp.array_equal(y, y_ref))

    print("KERNEL_OK")
</pallas_src>

<mosaic_0001>
module attributes {stable_mosaic.version = 11 : i64} {
  func.func @_block_transpose_kernel(%arg0: i32, %arg1: i32, %arg2: i32, %arg3: i32, %arg4: memref<1x4x1x16x128xf32, #tpu.memory_space<vmem>>, %arg5: memref<1x16x1x4x128xf32, #tpu.memory_space<vmem>>) attributes {dimension_semantics = [#tpu.dimension_semantics<parallel>, #tpu.dimension_semantics<parallel>, #tpu.dimension_semantics<parallel>, #tpu.dimension_semantics<parallel>], iteration_bounds = array<i64: 2, 1, 1, 1>, scalar_prefetch = 0 : i64, scratch_operands = 0 : i64, tpu.core_type = #tpu.core_type<tc>, window_params = [{transform_indices = @transform_0, window_bounds = array<i64: 1, 4, 1, 16, 128>}, {transform_indices = @transform_1, window_bounds = array<i64: 1, 16, 1, 4, 128>}]} {
    %c0 = arith.constant 0 : index
    %c0_0 = arith.constant 0 : index
    %c0_1 = arith.constant 0 : index
    %c0_2 = arith.constant 0 : index
    %c0_3 = arith.constant 0 : index
    %0 = vector.load %arg4[%c0, %c0_0, %c0_1, %c0_2, %c0_3] : memref<1x4x1x16x128xf32, #tpu.memory_space<vmem>>, vector<1x4x1x16x128xf32>
    %1 = tpu.transpose %0, [0, 3, 2, 1, 4] : vector<1x4x1x16x128xf32> -> vector<1x16x1x4x128xf32>
    %c0_4 = arith.constant 0 : index
    %c0_5 = arith.constant 0 : index
    %c0_6 = arith.constant 0 : index
    %c0_7 = arith.constant 0 : index
    %c0_8 = arith.constant 0 : index
    %2 = vector.load %arg5[%c0_4, %c0_5, %c0_6, %c0_7, %c0_8] : memref<1x16x1x4x128xf32, #tpu.memory_space<vmem>>, vector<1x16x1x4x128xf32>
    tpu.vector_store %arg5[%c0_4, %c0_5, %c0_6, %c0_7, %c0_8], %1 {strides = array<i32>} : memref<1x16x1x4x128xf32, #tpu.memory_space<vmem>>, vector<1x16x1x4x128xf32>,
    return
  }
  func.func @transform_0(%arg0: i32, %arg1: i32, %arg2: i32, %arg3: i32) -> (i32, i32, i32, i32, i32) {
    %c0_i32 = arith.constant 0 : i32
    %c0_i32_0 = arith.constant 0 : i32
    return %arg0, %arg2, %arg1, %arg3, %c0_i32 : i32, i32, i32, i32, i32
  }
  func.func @transform_1(%arg0: i32, %arg1: i32, %arg2: i32, %arg3: i32) -> (i32, i32, i32, i32, i32) {
    %c0_i32 = arith.constant 0 : i32
    %c0_i32_0 = arith.constant 0 : i32
    return %arg0, %arg3, %arg1, %arg2, %c0_i32 : i32, i32, i32, i32, i32
  }
}

</mosaic_0001>

<llo_original>
// kernel: tpu_custom_call.1
$region0: #{tpu_custom_call.1}
  #allocation0 [shape = 'u32[]', space=smem, size = 0x4, offset = 0x4, fixed_abs, tag = 'smem constant byte address 0x4 - core index']
  #allocation1 [shape = 'u32[144,128]{1,0:T(1,128)}', space=vmem, size = 0x12000, scoped, tag = 'internal scratch']
  %s0 = inlined_call_operand.hbm [shape: f32[2,4,1,16,128], index: 0, kind: input, shape index: {}]
  %s1 = inlined_call_operand.hbm [shape: f32[2,16,1,4,128], index: 1, kind: output, shape index: {}]
  %s2 = sld [smem:[#allocation0]]
  $region41: #{tpu_custom_call.1} parent=0
    _
  %s4 = ssub.s32 1, %s2
  %s5 = scalar_select 0, %s4, %s2
  $region1: #{tpu_custom_call.1} parent=0
    #allocation2 [shape = 'u8[65536]{0}', space=vmem, size = 0x10000, scoped, tag = 'input window, operand 0']
    #allocation3 [shape = 's32[2]{0}', space=sflag, size = 0x8, scoped, tag = 'scoped memory for tpu_custom_call.1']
    #allocation4 [shape = 's32[2]{0}', space=sflag, size = 0x8, scoped, tag = 'scoped memory for tpu_custom_call.1']
    #allocation5 [shape = 'u8[65536]{0}', space=vmem, size = 0x10000, scoped, tag = 'output window, operand 0']
    %6 = vsyncpa [#allocation3], 0
    %s7 = scalar_lea.sflag [#allocation3], 1
    %8 = vsyncpa %s7, 0
    %9 = vsyncpa [#allocation4], 0
    %s10 = scalar_lea.sflag [#allocation4], 1
    %11 = vsyncpa %s10, 0
    loop: start=0, step=1, limit=4
    $region2: #{tpu_custom_call.1} parent=1 // loop_pre_header
      _
    $region3: #{tpu_custom_call.1} parent=1 // loop_header
      %s13 = sphi 0, %s17
      %p14 = scmp.ge.s32.totalorder %s13, 4
      %s20 = sphi 0, %s46
      %s21 = sphi 0, %s42
      %s22 = sphi 0, %s38
      %s23 = sphi 0, %s34
      %s24 = sphi 0, %s20
      %s25 = sphi 0, %s21
      %s26 = sphi 0, %s22
      %s27 = sphi 0, %s23
      %s28 = sphi 0, %s24
      %s29 = sphi 0, %s25
      %s30 = sphi 0, %s26
      %s31 = sphi 0, %s27
      %s55 = sphi 0, %s57
      %s58 = sphi 0, %s55
      %s59 = sphi 0, %s58
      %s75 = sphi 0, %s59
      %s87 = sphi 0, %s89
      %s90 = sphi 0, %s87
      %s91 = sphi 0, %s90
      %s107 = sphi 0, %s91
    $region4: #{tpu_custom_call.1} parent=1 // loop_header_branch
      %16 = sbr.rel (%p14) target = $region8
    $region5: #{tpu_custom_call.1} parent=1 // loop_body
      %s18 = ssub.s32 %s13, 1
      %s19 = ssub.s32 %s13, 2
      %s32 = sadd.s32 1, %s23
      %p33 = scmp.ge.s32.totalorder %s32, 1
      %s34 = scalar_select %p33, 0, %s32
      %s35 = sadd.s32 1, %s22
      %s36 = scalar_select %p33, %s35, %s22
      %p37 = scmp.ge.s32.totalorder %s36, 1
      %s38 = scalar_select %p37, 0, %s36
      %s39 = sadd.s32 1, %s21
      %s40 = scalar_select %p37, %s39, %s21
      %p41 = scmp.ge.s32.totalorder %s40, 1
      %s42 = scalar_select %p41, 0, %s40
      %s43 = sadd.s32 1, %s20
      %s44 = scalar_select %p41, %s43, %s20
      %p45 = scmp.ge.s32.totalorder %s44, 2
      %s46 = scalar_select %p45, 0, %s44
      %s47 = ssub.s32 %s20, %s46
      %s48 = ssub.s32 %s22, %s38
      %s49 = sor.u32 %s47, %s48
      %s50 = ssub.s32 %s21, %s42
      %s51 = sor.u32 %s49, %s50
      %s52 = ssub.s32 %s23, %s34
      %s53 = sor.u32 %s51, %s52
      %p54 = scmp.eq.s32.totalorder %s53, 0
      %s56 = sadd.s32 %s55, 1
      %s57 = scalar_select %p54, %s55, %s56
      %p60 = pneg %p54
      %p61 = scmp.eq.s32.totalorder %s13, 1
      %p62 = por %p60, %p61
      %p63 = scmp.ne.s32.totalorder %s55, %s58
      %p64 = scmp.eq.s32.totalorder %s13, 0
      %p65 = por %p63, %p64
      %p66 = scmp.ne.s32.totalorder %s55, %s58
      %p67 = scmp.eq.s32.totalorder %s18, 1
      %p68 = por %p66, %p67
      %p69 = scmp.ne.s32.totalorder %s58, %s59
      %p70 = scmp.eq.s32.totalorder %s18, 0
      %p71 = por %p69, %p70
      %p72 = scmp.ne.s32.totalorder %s58, %s59
      %p73 = scmp.eq.s32.totalorder %s19, 1
      %p74 = por %p72, %p73
      %p76 = scmp.ne.s32.totalorder %s59, %s75
      %p77 = scmp.eq.s32.totalorder %s19, 0
      %p78 = por %p76, %p77
      %s79 = ssub.s32 %s20, %s46
      %s80 = ssub.s32 %s23, %s34
      %s81 = sor.u32 %s79, %s80
      %s82 = ssub.s32 %s21, %s42
      %s83 = sor.u32 %s81, %s82
      %s84 = ssub.s32 %s22, %s38
      %s85 = sor.u32 %s83, %s84
      %p86 = scmp.eq.s32.totalorder %s85, 0
      %s88 = sadd.s32 %s87, 1
      %s89 = scalar_select %p86, %s87, %s88
      %p92 = pneg %p86
      %p93 = scmp.eq.s32.totalorder %s13, 1
      %p94 = por %p92, %p93
      %p95 = scmp.ne.s32.totalorder %s87, %s90
      %p96 = scmp.eq.s32.totalorder %s13, 0
      %p97 = por %p95, %p96
      %p98 = scmp.ne.s32.totalorder %s87, %s90
      %p99 = scmp.eq.s32.totalorder %s18, 1
      %p100 = por %p98, %p99
      %p101 = scmp.ne.s32.totalorder %s90, %s91
      %p102 = scmp.eq.s32.totalorder %s18, 0
      %p103 = por %p101, %p102
      %p104 = scmp.ne.s32.totalorder %s90, %s91
      %p105 = scmp.eq.s32.totalorder %s19, 1
      %p106 = por %p104, %p105
      %p108 = scmp.ne.s32.totalorder %s91, %s107
      %p109 = scmp.eq.s32.totalorder %s19, 0
      %p110 = por %p108, %p109
      %p111 = scmp.le.s32.totalorder 1, %s13
      %p112 = scmp.lt.s32.totalorder %s13, 3
      %p113 = pnand %p111, %p112
      %p114 = pneg %p113
      // Predicated region
      $region9: #{tpu_custom_call.1} parent=5 // pred_check
        _
      $region10: #{tpu_custom_call.1} parent=5 // pred_check_branch
        %116 = sbr.rel (%p113) target = $region12
      $region11: #{tpu_custom_call.1} parent=5 // pred_region
        %s117 = ssub.s32 %s13, 1
      $region12: #{tpu_custom_call.1} parent=5 // pred_fallthru
        _
      %p118 = scmp.lt.s32.totalorder %s13, 2
      // Predicated region
      $region13: #{tpu_custom_call.1} parent=5 // pred_check
        %p119 = pneg %p118
      $region14: #{tpu_custom_call.1} parent=5 // pred_check_branch
        %121 = sbr.rel (%p119) target = $region16
      $region15: #{tpu_custom_call.1} parent=5 // pred_region
        // Predicated region
        $region17: #{tpu_custom_call.1} parent=15 // pred_check
          %p122 = pneg %p65
        $region18: #{tpu_custom_call.1} parent=15 // pred_check_branch
          %124 = sbr.rel (%p122) target = $region20
        $region19: #{tpu_custom_call.1} parent=15 // pred_region
          %s125 = sand.u32 %s55, 1
          %s126 = scalar_lea.sflag [#allocation3], %s125
          %s127 = sand.u32 %s55, 1
          %s128 = smul.addr %s127, 64
          %s129 = scalar_lea.vmem [#allocation2], %s128
          %s130 = smul.u32 4, %s22
          %s131 = smul.u32 2, %s23
          %s133 = ssub.s32 1024, 1024
          %134 = vsyncadd %s126, %s133
          %s135 = smul.addr %s21, 2
          %s136 = sadd.s32 %s131, %s135
          %s137 = smul.addr %s130, 2
          %s138 = sadd.s32 %s136, %s137
          %s139 = smul.addr %s20, 8
          %s140 = sadd.s32 %s138, %s139
          %s141 = smul.addr %s140, 128
          %s142 = scalar_lea.hbm %s0, %s141
          %s143 = sshll.u32 %s129, 4
          %s144 = int_to_ptr.vmem [resolvable:$true] %s143
          %149 = dma.hbm_to_vmem [thread:$0]  %s142, 1024, %s144, %s126, 128, 128, 8
        $region20: #{tpu_custom_call.1} parent=15 // pred_fallthru
          _
      $region16: #{tpu_custom_call.1} parent=5 // pred_fallthru
        _
      %p150 = scmp.le.s32.totalorder 1, %s13
      %p151 = scmp.lt.s32.totalorder %s13, 3
      %p152 = pnand %p150, %p151
      %p153 = pneg %p152
      // Predicated region
      $region21: #{tpu_custom_call.1} parent=5 // pred_check
        _
      $region22: #{tpu_custom_call.1} parent=5 // pred_check_branch
        %155 = sbr.rel (%p152) target = $region24
      $region23: #{tpu_custom_call.1} parent=5 // pred_region
        %s156 = ssub.s32 %s13, 1
        %s157 = sand.u32 %s58, 1
        %s158 = scalar_lea.sflag [#allocation3], %s157
        %s159 = sand.u32 %s58, 1
        %s160 = smul.addr %s159, 64
        %s161 = scalar_lea.vmem [#allocation2], %s160
        // Predicated region
        $region25: #{tpu_custom_call.1} parent=23 // pred_check
          %p162 = pneg %p71
        $region26: #{tpu_custom_call.1} parent=23 // pred_check_branch
          %164 = sbr.rel (%p162) target = $region28
        $region27: #{tpu_custom_call.1} parent=23 // pred_region
          %165 = dma.done %s158, 1024
        $region28: #{tpu_custom_call.1} parent=23 // pred_fallthru
          _
        %s166 = sand.u32 %s58, 1
        %s167 = scalar_lea.sflag [#allocation3], %s166
        %s168 = sand.u32 %s58, 1
        %s169 = smul.addr %s168, 64
        %s170 = scalar_lea.vmem [#allocation2], %s169
        %p171 = pneg %p71
        %p172 = pneg %p68
        %p173 = pneg %p103
        %p174 = pneg %p100
        %s175 = sand.u32 %s90, 1
        %s176 = scalar_lea.sflag [#allocation4], %s175
        %s177 = sand.u32 %s90, 1
        %s178 = smul.addr %s177, 64
        %s179 = scalar_lea.vmem [#allocation5], %s178
        %s180 = smul.u32 4, %s26
        %s181 = smul.u32 2, %s27
        %s182 = smul.u32 16, %s27
        %v183 = vld [vmem:[%s161] sm:$0xff]
        %v184 = vld [vmem:[%s161 + $0x8] sm:$0xff]
        %v185 = vld [vmem:[%s161 + $0x10] sm:$0xff]
        %v186 = vld [vmem:[%s161 + $0x18] sm:$0xff]
        %v187 = vld [vmem:[%s161 + $0x20] sm:$0xff]
        %v188 = vld [vmem:[%s161 + $0x28] sm:$0xff]
        %v189 = vld [vmem:[%s161 + $0x30] sm:$0xff]
        %v190 = vld [vmem:[%s161 + $0x38] sm:$0xff]
        %v191 = vcombine.low %v183, %v187
        %v192 = vcombine.high %v183, %v187
        %v194 = vunpack.c.l.s4 1983009808
        %v195 = vunpack.c.0.s8 %v194
        %v196 = vlaneseq
        %v197 = vshrl.u32 %v196, 7
        %v198 = vsub.s32 %v195, %v197
        %v199 = vrot.slane %v191, %v198
        %v201 = vunpack.c.l.s4 1983009808
        %v202 = vunpack.c.0.s8 %v201
        %v203 = vlaneseq
        %v204 = vshrl.u32 %v203, 7
        %v205 = vsub.s32 %v202, %v204
        %v206 = vrot.slane %v192, %v205
        %v207 = vcombine.low %v185, %v189
        %v208 = vcombine.high %v185, %v189
        %v210 = vunpack.c.l.s4 1983009808
        %v211 = vunpack.c.0.s8 %v210
        %v212 = vlaneseq
        %v213 = vshrl.u32 %v212, 7
        %v214 = vsub.s32 %v211, %v213
        %v215 = vrot.slane %v207, %v214
        %v217 = vunpack.c.l.s4 1983009808
        %v218 = vunpack.c.0.s8 %v217
        %v219 = vlaneseq
        %v220 = vshrl.u32 %v219, 7
        %v221 = vsub.s32 %v218, %v220
        %v222 = vrot.slane %v208, %v221
        %v223 = vcombine.low %v199, %v215
        %v224 = vcombine.high %v199, %v215
        %v226 = vunpack.c.l.s4 1934713408
        %v227 = vunpack.c.0.s8 %v226
        %v228 = vlaneseq
        %v229 = vshrl.u32 %v228, 7
        %v230 = vsub.s32 %v227, %v229
        %v231 = vrot.slane %v223, %v230
        %v233 = vunpack.c.l.s4 1934713408
        %v234 = vunpack.c.0.s8 %v233
        %v235 = vlaneseq
        %v236 = vshrl.u32 %v235, 7
        %v237 = vsub.s32 %v234, %v236
        %v238 = vrot.slane %v224, %v237
        %v239 = vcombine.low %v206, %v222
        %v240 = vcombine.high %v206, %v222
        %v242 = vunpack.c.l.s4 1934713408
        %v243 = vunpack.c.0.s8 %v242
        %v244 = vlaneseq
        %v245 = vshrl.u32 %v244, 7
        %v246 = vsub.s32 %v243, %v245
        %v247 = vrot.slane %v239, %v246
        %v249 = vunpack.c.l.s4 1934713408
        %v250 = vunpack.c.0.s8 %v249
        %v251 = vlaneseq
        %v252 = vshrl.u32 %v251, 7
        %v253 = vsub.s32 %v250, %v252
        %v254 = vrot.slane %v240, %v253
        %v255 = vcombine.high %v231, 0.0
        %v256 = vcombine.high %v238, 0.0
        %v257 = vcombine.high %v247, 0.0
        %v258 = vcombine.high %v254, 0.0
        %v259 = vcombine.low %v184, %v188
        %v260 = vcombine.high %v184, %v188
        %v262 = vunpack.c.l.s4 1983009808
        %v263 = vunpack.c.0.s8 %v262
        %v264 = vlaneseq
        %v265 = vshrl.u32 %v264, 7
        %v266 = vsub.s32 %v263, %v265
        %v267 = vrot.slane %v259, %v266
        %v269 = vunpack.c.l.s4 1983009808
        %v270 = vunpack.c.0.s8 %v269
        %v271 = vlaneseq
        %v272 = vshrl.u32 %v271, 7
        %v273 = vsub.s32 %v270, %v272
        %v274 = vrot.slane %v260, %v273
        %v275 = vcombine.low %v186, %v190
        %v276 = vcombine.high %v186, %v190
        %v278 = vunpack.c.l.s4 1983009808
        %v279 = vunpack.c.0.s8 %v278
        %v280 = vlaneseq
        %v281 = vshrl.u32 %v280, 7
        %v282 = vsub.s32 %v279, %v281
        %v283 = vrot.slane %v275, %v282
        %v285 = vunpack.c.l.s4 1983009808
        %v286 = vunpack.c.0.s8 %v285
        %v287 = vlaneseq
        %v288 = vshrl.u32 %v287, 7
        %v289 = vsub.s32 %v286, %v288
        %v290 = vrot.slane %v276, %v289
        %v291 = vcombine.low %v267, %v283
        %v292 = vcombine.high %v267, %v283
        %v294 = vunpack.c.l.s4 1934713408
        %v295 = vunpack.c.0.s8 %v294
        %v296 = vlaneseq
        %v297 = vshrl.u32 %v296, 7
        %v298 = vsub.s32 %v295, %v297
        %v299 = vrot.slane %v291, %v298
        %v301 = vunpack.c.l.s4 1934713408
        %v302 = vunpack.c.0.s8 %v301
        %v303 = vlaneseq
        %v304 = vshrl.u32 %v303, 7
        %v305 = vsub.s32 %v302, %v304
        %v306 = vrot.slane %v292, %v305
        %v307 = vcombine.low %v274, %v290
        %v308 = vcombine.high %v274, %v290
        %v310 = vunpack.c.l.s4 1934713408
        %v311 = vunpack.c.0.s8 %v310
        %v312 = vlaneseq
        %v313 = vshrl.u32 %v312, 7
        %v314 = vsub.s32 %v311, %v313
        %v315 = vrot.slane %v307, %v314
        %v317 = vunpack.c.l.s4 1934713408
        %v318 = vunpack.c.0.s8 %v317
        %v319 = vlaneseq
        %v320 = vshrl.u32 %v319, 7
        %v321 = vsub.s32 %v318, %v320
        %v322 = vrot.slane %v308, %v321
        %v323 = vcombine.high %v299, 0.0
        %v324 = vcombine.high %v306, 0.0
        %v325 = vcombine.high %v315, 0.0
        %v326 = vcombine.high %v322, 0.0
        %327 = vst [vmem:[%s179] sm:$0xf] %v231
        %328 = vst [vmem:[%s179 + $0x4] sm:$0xf] %v255
        %329 = vst [vmem:[%s179 + $0x8] sm:$0xf] %v238
        %330 = vst [vmem:[%s179 + $0xc] sm:$0xf] %v256
        %331 = vst [vmem:[%s179 + $0x10] sm:$0xf] %v247
        %332 = vst [vmem:[%s179 + $0x14] sm:$0xf] %v257
        %333 = vst [vmem:[%s179 + $0x18] sm:$0xf] %v254
        %334 = vst [vmem:[%s179 + $0x1c] sm:$0xf] %v258
        %335 = vst [vmem:[%s179 + $0x20] sm:$0xf] %v299
        %336 = vst [vmem:[%s179 + $0x24] sm:$0xf] %v323
        %337 = vst [vmem:[%s179 + $0x28] sm:$0xf] %v306
        %338 = vst [vmem:[%s179 + $0x2c] sm:$0xf] %v324
        %339 = vst [vmem:[%s179 + $0x30] sm:$0xf] %v315
        %340 = vst [vmem:[%s179 + $0x34] sm:$0xf] %v325
        %341 = vst [vmem:[%s179 + $0x38] sm:$0xf] %v322
        %342 = vst [vmem:[%s179 + $0x3c] sm:$0xf] %v326
        %s343 = sand.u32 %s90, 1
        %s344 = scalar_lea.sflag [#allocation4], %s343
        %s345 = sand.u32 %s90, 1
        %s346 = smul.addr %s345, 64
        %s347 = scalar_lea.vmem [#allocation5], %s346
        // Predicated region
        $region29: #{tpu_custom_call.1} parent=23 // pred_check
          %p348 = pneg %p100
        $region30: #{tpu_custom_call.1} parent=23 // pred_check_branch
          %350 = sbr.rel (%p348) target = $region32
        $region31: #{tpu_custom_call.1} parent=23 // pred_region
          %s351 = smul.u32 16, %s27
          %s353 = ssub.s32 1024, 1024
          %354 = vsyncadd %s344, %s353
          %s355 = sadd.s32 %s26, %s25
          %s356 = sadd.s32 %s355, %s351
          %s357 = smul.addr %s24, 16
          %s358 = sadd.s32 %s356, %s357
          %s359 = smul.addr %s358, 64
          %s360 = scalar_lea.hbm %s1, %s359
          %s361 = sshll.u32 %s347, 4
          %s362 = int_to_ptr.vmem [resolvable:$true] %s361
          %367 = dma.vmem_to_hbm [thread:$0]  %s362, 1024, %s360, %s344, 64, 64, 4
        $region32: #{tpu_custom_call.1} parent=23 // pred_fallthru
          _
      $region24: #{tpu_custom_call.1} parent=5 // pred_fallthru
        _
      %p368 = scmp.le.s32.totalorder 2, %s13
      // Predicated region
      $region33: #{tpu_custom_call.1} parent=5 // pred_check
        %p369 = pneg %p368
      $region34: #{tpu_custom_call.1} parent=5 // pred_check_branch
        %371 = sbr.rel (%p369) target = $region36
      $region35: #{tpu_custom_call.1} parent=5 // pred_region
        %s372 = ssub.s32 %s13, 2
        // Predicated region
        $region37: #{tpu_custom_call.1} parent=35 // pred_check
          %p373 = pneg %p106
        $region38: #{tpu_custom_call.1} parent=35 // pred_check_branch
          %375 = sbr.rel (%p373) target = $region40
        $region39: #{tpu_custom_call.1} parent=35 // pred_region
          %s376 = sand.u32 %s91, 1
          %s377 = scalar_lea.sflag [#allocation4], %s376
          %s378 = sand.u32 %s91, 1
          %s379 = smul.addr %s378, 64
          %s380 = scalar_lea.vmem [#allocation5], %s379
          %381 = dma.done %s377, 1024
        $region40: #{tpu_custom_call.1} parent=35 // pred_fallthru
          _
      $region36: #{tpu_custom_call.1} parent=5 // pred_fallthru
        _
    $region6: #{tpu_custom_call.1} parent=1 // loop_footer
      %s17 = sadd.s32 1, %s13
    $region7: #{tpu_custom_call.1} parent=1 // loop_footer_branch
      %12 = sbr.rel target = $region3
    $region8: #{tpu_custom_call.1} parent=1 // loop_exit
      _
    %382 = vsyncpa [#allocation3], 1
    %s383 = scalar_lea.sflag [#allocation3], 1
    %384 = vsyncpa %s383, 1
    %385 = vsyncpa [#allocation4], 1
    %s386 = scalar_lea.sflag [#allocation4], 1
    %387 = vsyncpa %s386, 1

</llo_original>
